<compile_context>
chip_gen: v6e
topology: v6e:2x2x1
jax: 0.10.0
libtpu: 0.0.40
codegen_flags: <defaults>
</compile_context>

<pallas_src>
import jax
import jax.numpy as jnp
from jax.experimental import pallas as pl
from jax.experimental.pallas import tpu as pltpu


def _round_up(x: int, m: int) -> int:
    return ((x + m - 1) // m) * m


def _linear_prelu_kernel_2d(x_ref, w_ref, ba_ref, o_ref):
    """Collapsed-K path: one (TM, TN) output tile, full F per dot."""
    x = x_ref[...].astype(jnp.bfloat16)            # f32 -> bf16 on the VPU
    z = jnp.dot(x, w_ref[...], preferred_element_type=jnp.float32)
    ba = ba_ref[...]                               # (2, TN) f32
    z = z + ba[0:1, :]                             # + bias
    alpha = ba[1:2, :]
    o_ref[...] = jnp.where(z > 0, z, alpha * z).astype(o_ref.dtype)


def _linear_prelu_kernel_3d(x_ref, w_ref, ba_ref, o_ref, acc_ref):
    """Fallback for very large F: K reduction axis with resident accumulator."""
    k = pl.program_id(2)

    @pl.when(k == 0)
    def _():
        acc_ref[...] = jnp.zeros_like(acc_ref)

    acc_ref[...] += jnp.dot(
        x_ref[...].astype(jnp.bfloat16), w_ref[...],
        preferred_element_type=jnp.float32)

    @pl.when(k == pl.num_programs(2) - 1)
    def _():
        ba = ba_ref[...]
        z = acc_ref[...] + ba[0:1, :]
        alpha = ba[1:2, :]
        o_ref[...] = jnp.where(z > 0, z, alpha * z).astype(o_ref.dtype)


def linear_prelu(x, w, b, alpha, *, tm=512, collapse_k_max=2048,
                 out_dtype=jnp.float32):
    """out = PReLU(x @ w + b) with per-channel alpha.

    x: (N, F) f32; w: (F, C); b: (C,); alpha: (C,).
    """
    n, f = x.shape
    f2, c = w.shape
    assert f == f2, (f, f2)

    c_pad = _round_up(c, 128)      # lane-dense output channels
    f_pad = _round_up(f, 128)      # lane-dense contraction dim

    # Channel tile: prefer 256 (v6e/v7x MXU width) when it divides c_pad.
    tn = 256 if c_pad % 256 == 0 else 128

    # Row tile: large (mem-bound layer), but no bigger than the problem.
    tm = min(tm, _round_up(n, 8))

    collapse_k = f_pad <= collapse_k_max
    if collapse_k:
        tk = f_pad
    else:
        tk = 512 if f_pad % 512 == 0 else (256 if f_pad % 256 == 0 else 128)

    # --- operand prep -------------------------------------------------------
    # x: keep f32, no N padding, pad F only if not already lane-aligned.
    xp = x if f_pad == f else (
        jnp.zeros((n, f_pad), x.dtype).at[:, :f].set(x))
    # w: tiny -> pre-cast to bf16 (+ zero-pad F/C) on the wrapper.
    w_bf = w.astype(jnp.bfloat16)
    wp = w_bf if (f_pad == f and c_pad == c) else (
        jnp.zeros((f_pad, c_pad), jnp.bfloat16).at[:f, :c].set(w_bf))
    # bias + alpha fused into one (2, c_pad) f32 operand.
    ba = (jnp.zeros((2, c_pad), jnp.float32)
          .at[0, :c].set(b.astype(jnp.float32))
          .at[1, :c].set(alpha.astype(jnp.float32)))

    # --- grid / specs -------------------------------------------------------
    if collapse_k:
        grid = (pl.cdiv(n, tm), c_pad // tn)
        in_specs = [
            pl.BlockSpec((tm, f_pad), lambda i, j: (i, 0)),   # x tile
            pl.BlockSpec((f_pad, tn), lambda i, j: (0, j)),   # w tile
            pl.BlockSpec((2, tn), lambda i, j: (0, j)),       # bias/alpha
        ]
        out_specs = pl.BlockSpec((tm, tn), lambda i, j: (i, j))
        scratch = []
        dims = ("parallel", "parallel")
        kernel = _linear_prelu_kernel_2d
    else:
        grid = (pl.cdiv(n, tm), c_pad // tn, f_pad // tk)
        in_specs = [
            pl.BlockSpec((tm, tk), lambda i, j, k: (i, k)),
            pl.BlockSpec((tk, tn), lambda i, j, k: (k, j)),
            pl.BlockSpec((2, tn), lambda i, j, k: (0, j)),
        ]
        out_specs = pl.BlockSpec((tm, tn), lambda i, j, k: (i, j))
        scratch = [pltpu.VMEM((tm, tn), jnp.float32)]
        dims = ("parallel", "parallel", "arbitrary")
        kernel = _linear_prelu_kernel_3d

    # VMEM budget: double-buffered tiles + accumulator, clamped for v7x (64 MiB
    # physical).  Defaults (tm<=512, tk<=2048, tn<=256) stay well under 48 MiB.
    vmem_need = (2 * tm * tk * 4          # x tiles (f32)
                 + 2 * tk * tn * 2        # w tiles (bf16)
                 + 2 * tm * tn * 4        # out tiles (f32)
                 + 2 * 2 * tn * 4)        # bias/alpha
    if not collapse_k:
        vmem_need += tm * tn * 4          # accumulator
    vmem_limit = min(max(int(vmem_need * 1.5) + (4 << 20), 16 << 20), 48 << 20)

    out = pl.pallas_call(
        kernel,
        out_shape=jax.ShapeDtypeStruct((n, c_pad), out_dtype),
        grid_spec=pltpu.PrefetchScalarGridSpec(
            num_scalar_prefetch=0,
            grid=grid,
            in_specs=in_specs,
            out_specs=out_specs,
            scratch_shapes=scratch,
        ),
        compiler_params=pltpu.CompilerParams(
            dimension_semantics=dims,
            vmem_limit_bytes=vmem_limit,
        ),
    )(xp, wp, ba)

    return out if c_pad == c else out[:, :c]


if __name__ == "__main__":
    # Small, deliberately non-tile-aligned shapes (N rows, F features, C out).
    N, F, C = 300, 192, 72

    key = jax.random.PRNGKey(0)
    k_x, k_w, k_b = jax.random.split(key, 3)

    x = jax.random.normal(k_x, (N, F), dtype=jnp.float32)

    # PyTorch nn.Linear default init: U(-1/sqrt(fan_in), 1/sqrt(fan_in)).
    limit = 1.0 / (F ** 0.5)
    w_torch = jax.random.uniform(k_w, (C, F), minval=-limit, maxval=limit,
                                 dtype=jnp.float32)      # torch (out, in) layout
    b = jax.random.uniform(k_b, (C,), minval=-limit, maxval=limit,
                           dtype=jnp.float32)
    alpha = jnp.full((C,), 0.25, dtype=jnp.float32)       # PReLU default

    w = w_torch.T                                         # (F, C) for x @ w

    out = linear_prelu(x, w, b, alpha)
    jax.block_until_ready(out)

    # Reference matched to the kernel's bf16-operand / f32-accumulate math.
    x_bf = x.astype(jnp.bfloat16).astype(jnp.float32)
    w_bf = w.astype(jnp.bfloat16).astype(jnp.float32)
    z_ref = jnp.dot(x_bf, w_bf, precision=jax.lax.Precision.HIGHEST) + b[None, :]
    ref = jnp.where(z_ref > 0, z_ref, alpha[None, :] * z_ref)
    assert out.shape == (N, C), out.shape
    assert jnp.allclose(out, ref, atol=1e-3, rtol=1e-3), float(
        jnp.max(jnp.abs(out - ref)))

    print("KERNEL_OK")
</pallas_src>

<mosaic_0001>
module attributes {stable_mosaic.version = 11 : i64} {
  func.func @_linear_prelu_kernel_2d(%arg0: i32, %arg1: i32, %arg2: memref<304x256xf32, #tpu.memory_space<vmem>>, %arg3: memref<256x128xbf16, #tpu.memory_space<vmem>>, %arg4: memref<2x128xf32, #tpu.memory_space<vmem>>, %arg5: memref<304x128xf32, #tpu.memory_space<vmem>>) attributes {dimension_semantics = [#tpu.dimension_semantics<parallel>, #tpu.dimension_semantics<parallel>], iteration_bounds = array<i64: 1, 1>, scalar_prefetch = 0 : i64, scratch_operands = 0 : i64, tpu.core_type = #tpu.core_type<tc>, window_params = [{transform_indices = @transform_0, window_bounds = array<i64: 304, 256>}, {transform_indices = @transform_1, window_bounds = array<i64: 256, 128>}, {transform_indices = @transform_2, window_bounds = array<i64: 2, 128>}, {transform_indices = @transform_3, window_bounds = array<i64: 304, 128>}]} {
    %c0 = arith.constant 0 : index
    %c0_0 = arith.constant 0 : index
    %0 = vector.load %arg2[%c0, %c0_0] : memref<304x256xf32, #tpu.memory_space<vmem>>, vector<304x256xf32>
    %1 = arith.truncf %0 : vector<304x256xf32> to vector<304x256xbf16>
    %c0_1 = arith.constant 0 : index
    %c0_2 = arith.constant 0 : index
    %2 = vector.load %arg3[%c0_1, %c0_2] : memref<256x128xbf16, #tpu.memory_space<vmem>>, vector<256x128xbf16>
    %cst = arith.constant dense<0.000000e+00> : vector<304x128xf32>
    %3 = tpu.matmul %1, %2, %cst {dimension_numbers = #tpu.dot_dimension_numbers<[1], [0], [0], [1], [0, 0, 1, 1], [], []>} : vector<304x256xbf16>, vector<256x128xbf16>, vector<304x128xf32> -> vector<304x128xf32>
    %c0_3 = arith.constant 0 : index
    %c0_4 = arith.constant 0 : index
    %4 = vector.load %arg4[%c0_3, %c0_4] : memref<2x128xf32, #tpu.memory_space<vmem>>, vector<2x128xf32>
    %5 = vector.extract_strided_slice %4 {offsets = [0, 0], sizes = [1, 128], strides = [1, 1]} : vector<2x128xf32> to vector<1x128xf32>
    %6 = vector.broadcast %5 : vector<1x128xf32> to vector<304x128xf32>
    %7 = arith.addf %3, %6 : vector<304x128xf32>
    %8 = vector.extract_strided_slice %4 {offsets = [1, 0], sizes = [1, 128], strides = [1, 1]} : vector<2x128xf32> to vector<1x128xf32>
    %cst_5 = arith.constant 0.000000e+00 : f32
    %9 = vector.broadcast %cst_5 : f32 to vector<304x128xf32>
    %10 = arith.cmpf ogt, %7, %9 : vector<304x128xf32>
    %11 = vector.broadcast %8 : vector<1x128xf32> to vector<304x128xf32>
    %12 = arith.mulf %11, %7 : vector<304x128xf32>
    %13 = arith.select %10, %7, %12 : vector<304x128xi1>, vector<304x128xf32>
    %c0_6 = arith.constant 0 : index
    %c0_7 = arith.constant 0 : index
    %14 = vector.load %arg5[%c0_6, %c0_7] : memref<304x128xf32, #tpu.memory_space<vmem>>, vector<304x128xf32>
    tpu.vector_store %arg5[%c0_6, %c0_7], %13 {strides = array<i32>} : memref<304x128xf32, #tpu.memory_space<vmem>>, vector<304x128xf32>,
    return
  }
  func.func @transform_0(%arg0: i32, %arg1: i32) -> (i32, i32) {
    %c0_i32 = arith.constant 0 : i32
    %c0_i32_0 = arith.constant 0 : i32
    return %arg0, %c0_i32 : i32, i32
  }
  func.func @transform_1(%arg0: i32, %arg1: i32) -> (i32, i32) {
    %c0_i32 = arith.constant 0 : i32
    %c0_i32_0 = arith.constant 0 : i32
    return %c0_i32, %arg1 : i32, i32
  }
  func.func @transform_2(%arg0: i32, %arg1: i32) -> (i32, i32) {
    %c0_i32 = arith.constant 0 : i32
    %c0_i32_0 = arith.constant 0 : i32
    return %c0_i32, %arg1 : i32, i32
  }
  func.func @transform_3(%arg0: i32, %arg1: i32) -> (i32, i32) {
    %c0_i32 = arith.constant 0 : i32
    return %arg0, %arg1 : i32, i32
  }
}

</mosaic_0001>

<llo_original>
// kernel: tpu_custom_call.1
$region0: #{tpu_custom_call.1}
  #allocation0 [shape = 'u32[]', space=smem, size = 0x4, offset = 0x4, fixed_abs, tag = 'smem constant byte address 0x4 - core index']
  #allocation1 [shape = 'u32[144,128]{1,0:T(1,128)}', space=vmem, size = 0x12000, scoped, tag = 'internal scratch']
  %s0 = inlined_call_operand.hbm [shape: f32[300,256], index: 0, kind: input, shape index: {}]
  %s1 = inlined_call_operand.hbm [shape: bf16[256,128], index: 1, kind: input, shape index: {}]
  %s2 = inlined_call_operand.vmem [shape: f32[2,128], index: 2, kind: input, shape index: {}]
  %s3 = inlined_call_operand.hbm [shape: f32[300,128], index: 3, kind: output, shape index: {}]
  %s4 = sld [smem:[#allocation0]]
  $region30: #{tpu_custom_call.1} parent=0
    _
  %s6 = ssub.s32 1, %s4
  %s7 = scalar_select 0, %s6, %s4
  $region1: #{tpu_custom_call.1} parent=0
    #allocation2 [shape = 'u8[311296]{0}', space=vmem, size = 0x4c000, scoped, tag = 'input window, operand 0, single buffered']
    #allocation3 [shape = 's32[1]{0}', space=sflag, size = 0x4, scoped, tag = 'scoped memory for tpu_custom_call.1']
    #allocation4 [shape = 's32[1]{0}', space=sflag, size = 0x4, scoped, tag = 'scoped memory for tpu_custom_call.1']
    #allocation5 [shape = 'u8[65536]{0}', space=vmem, size = 0x10000, scoped, tag = 'input window, operand 1, single buffered']
    #allocation6 [shape = 's32[1]{0}', space=sflag, size = 0x4, scoped, tag = 'scoped memory for tpu_custom_call.1']
    #allocation7 [shape = 'u8[155648]{0}', space=vmem, size = 0x26000, scoped, tag = 'output window, operand 0, single buffered']
    %8 = vsyncpa [#allocation3], 0
    %9 = vsyncpa [#allocation6], 0
    %10 = vsyncpa [#allocation4], 0
    // Predicated region
    $region2: #{tpu_custom_call.1} parent=1 // pred_check
      _
    $region3: #{tpu_custom_call.1} parent=1 // pred_check_branch
      %12 = sbr.rel (0) target = $region5
    $region4: #{tpu_custom_call.1} parent=1 // pred_region
      %s14 = ssub.s32 9728, 9728
      %15 = vsyncadd [#allocation3], %s14
      %s16 = sshll.u32 [#allocation2], 4
      %s17 = int_to_ptr.vmem [resolvable:$true] %s16
      %22 = dma.hbm_to_vmem [thread:$0]  %s0, 9728, %s17, [#allocation3], 256, 256, 16
    $region5: #{tpu_custom_call.1} parent=1 // pred_fallthru
      _
    // Predicated region
    $region6: #{tpu_custom_call.1} parent=1 // pred_check
      _
    $region7: #{tpu_custom_call.1} parent=1 // pred_check_branch
      %24 = sbr.rel (0) target = $region9
    $region8: #{tpu_custom_call.1} parent=1 // pred_region
      %s26 = ssub.s32 2048, 2048
      %27 = vsyncadd [#allocation6], %s26
      %s28 = sshll.u32 [#allocation5], 4
      %s29 = int_to_ptr.vmem [resolvable:$true] %s28
      %34 = dma.hbm_to_vmem [thread:$0]  %s1, 2048, %s29, [#allocation6], 64, 64, 4
    $region9: #{tpu_custom_call.1} parent=1 // pred_fallthru
      _
    // Predicated region
    $region10: #{tpu_custom_call.1} parent=1 // pred_check
      _
    $region11: #{tpu_custom_call.1} parent=1 // pred_check_branch
      %36 = sbr.rel (0) target = $region13
    $region12: #{tpu_custom_call.1} parent=1 // pred_region
      _
    $region13: #{tpu_custom_call.1} parent=1 // pred_fallthru
      _
    // Predicated region
    $region14: #{tpu_custom_call.1} parent=1 // pred_check
      _
    $region15: #{tpu_custom_call.1} parent=1 // pred_check_branch
      %38 = sbr.rel (0) target = $region17
    $region16: #{tpu_custom_call.1} parent=1 // pred_region
      %39 = dma.done [#allocation3], 9728
    $region17: #{tpu_custom_call.1} parent=1 // pred_fallthru
      _
    // Predicated region
    $region18: #{tpu_custom_call.1} parent=1 // pred_check
      _
    $region19: #{tpu_custom_call.1} parent=1 // pred_check_branch
      %41 = sbr.rel (0) target = $region21
    $region20: #{tpu_custom_call.1} parent=1 // pred_region
      %42 = dma.done [#allocation6], 2048
    $region21: #{tpu_custom_call.1} parent=1 // pred_fallthru
      _
    %v44 = vld [vmem:[#allocation2] sm:$0xff]
    %v45 = vld [vmem:[#allocation2 + $0x8] sm:$0xff]
    %v46 = vld [vmem:[#allocation2 + $0x10] sm:$0xff]
    %v47 = vld [vmem:[#allocation2 + $0x18] sm:$0xff]
    %v48 = vld [vmem:[#allocation2 + $0x20] sm:$0xff]
    %v49 = vld [vmem:[#allocation2 + $0x28] sm:$0xff]
    %v50 = vld [vmem:[#allocation2 + $0x30] sm:$0xff]
    %v51 = vld [vmem:[#allocation2 + $0x38] sm:$0xff]
    %v52 = vld [vmem:[#allocation2 + $0x40] sm:$0xff]
    %v53 = vld [vmem:[#allocation2 + $0x48] sm:$0xff]
    %v54 = vld [vmem:[#allocation2 + $0x50] sm:$0xff]
    %v55 = vld [vmem:[#allocation2 + $0x58] sm:$0xff]
    %v56 = vld [vmem:[#allocation2 + $0x60] sm:$0xff]
    %v57 = vld [vmem:[#allocation2 + $0x68] sm:$0xff]
    %v58 = vld [vmem:[#allocation2 + $0x70] sm:$0xff]
    %v59 = vld [vmem:[#allocation2 + $0x78] sm:$0xff]
    %v60 = vld [vmem:[#allocation2 + $0x80] sm:$0xff]
    %v61 = vld [vmem:[#allocation2 + $0x88] sm:$0xff]
    %v62 = vld [vmem:[#allocation2 + $0x90] sm:$0xff]
    %v63 = vld [vmem:[#allocation2 + $0x98] sm:$0xff]
    %v64 = vld [vmem:[#allocation2 + $0xa0] sm:$0xff]
    %v65 = vld [vmem:[#allocation2 + $0xa8] sm:$0xff]
    %v66 = vld [vmem:[#allocation2 + $0xb0] sm:$0xff]
    %v67 = vld [vmem:[#allocation2 + $0xb8] sm:$0xff]
    %v68 = vld [vmem:[#allocation2 + $0xc0] sm:$0xff]
    %v69 = vld [vmem:[#allocation2 + $0xc8] sm:$0xff]
    %v70 = vld [vmem:[#allocation2 + $0xd0] sm:$0xff]
    %v71 = vld [vmem:[#allocation2 + $0xd8] sm:$0xff]
    %v72 = vld [vmem:[#allocation2 + $0xe0] sm:$0xff]
    %v73 = vld [vmem:[#allocation2 + $0xe8] sm:$0xff]
    %v74 = vld [vmem:[#allocation2 + $0xf0] sm:$0xff]
    %v75 = vld [vmem:[#allocation2 + $0xf8] sm:$0xff]
    %v76 = vld [vmem:[#allocation2 + $0x100] sm:$0xff]
    %v77 = vld [vmem:[#allocation2 + $0x108] sm:$0xff]
    %v78 = vld [vmem:[#allocation2 + $0x110] sm:$0xff]
    %v79 = vld [vmem:[#allocation2 + $0x118] sm:$0xff]
    %v80 = vld [vmem:[#allocation2 + $0x120] sm:$0xff]
    %v81 = vld [vmem:[#allocation2 + $0x128] sm:$0xff]
    %v82 = vld [vmem:[#allocation2 + $0x130] sm:$0xff]
    %v83 = vld [vmem:[#allocation2 + $0x138] sm:$0xff]
    %v84 = vld [vmem:[#allocation2 + $0x140] sm:$0xff]
    %v85 = vld [vmem:[#allocation2 + $0x148] sm:$0xff]
    %v86 = vld [vmem:[#allocation2 + $0x150] sm:$0xff]
    %v87 = vld [vmem:[#allocation2 + $0x158] sm:$0xff]
    %v88 = vld [vmem:[#allocation2 + $0x160] sm:$0xff]
    %v89 = vld [vmem:[#allocation2 + $0x168] sm:$0xff]
    %v90 = vld [vmem:[#allocation2 + $0x170] sm:$0xff]
    %v91 = vld [vmem:[#allocation2 + $0x178] sm:$0xff]
    %v92 = vld [vmem:[#allocation2 + $0x180] sm:$0xff]
    %v93 = vld [vmem:[#allocation2 + $0x188] sm:$0xff]
    %v94 = vld [vmem:[#allocation2 + $0x190] sm:$0xff]
    %v95 = vld [vmem:[#allocation2 + $0x198] sm:$0xff]
    %v96 = vld [vmem:[#allocation2 + $0x1a0] sm:$0xff]
    %v97 = vld [vmem:[#allocation2 + $0x1a8] sm:$0xff]
    %v98 = vld [vmem:[#allocation2 + $0x1b0] sm:$0xff]
    %v99 = vld [vmem:[#allocation2 + $0x1b8] sm:$0xff]
    %v100 = vld [vmem:[#allocation2 + $0x1c0] sm:$0xff]
    %v101 = vld [vmem:[#allocation2 + $0x1c8] sm:$0xff]
    %v102 = vld [vmem:[#allocation2 + $0x1d0] sm:$0xff]
    %v103 = vld [vmem:[#allocation2 + $0x1d8] sm:$0xff]
    %v104 = vld [vmem:[#allocation2 + $0x1e0] sm:$0xff]
    %v105 = vld [vmem:[#allocation2 + $0x1e8] sm:$0xff]
    %v106 = vld [vmem:[#allocation2 + $0x1f0] sm:$0xff]
    %v107 = vld [vmem:[#allocation2 + $0x1f8] sm:$0xff]
    %v108 = vld [vmem:[#allocation2 + $0x200] sm:$0xff]
    %v109 = vld [vmem:[#allocation2 + $0x208] sm:$0xff]
    %v110 = vld [vmem:[#allocation2 + $0x210] sm:$0xff]
    %v111 = vld [vmem:[#allocation2 + $0x218] sm:$0xff]
    %v112 = vld [vmem:[#allocation2 + $0x220] sm:$0xff]
    %v113 = vld [vmem:[#allocation2 + $0x228] sm:$0xff]
    %v114 = vld [vmem:[#allocation2 + $0x230] sm:$0xff]
    %v115 = vld [vmem:[#allocation2 + $0x238] sm:$0xff]
    %v116 = vld [vmem:[#allocation2 + $0x240] sm:$0xff]
    %v117 = vld [vmem:[#allocation2 + $0x248] sm:$0xff]
    %v118 = vld [vmem:[#allocation2 + $0x250] sm:$0xff]
    %v119 = vld [vmem:[#allocation2 + $0x258] sm:$0xff]
    %v120 = vpack.c.bf16 %v46, %v44
    %v121 = vpack.c.bf16 %v47, %v45
    %v122 = vpack.c.bf16 %v50, %v48
    %v123 = vpack.c.bf16 %v51, %v49
    %v124 = vpack.c.bf16 %v54, %v52
    %v125 = vpack.c.bf16 %v55, %v53
    %v126 = vpack.c.bf16 %v58, %v56
    %v127 = vpack.c.bf16 %v59, %v57
    %v128 = vpack.c.bf16 %v62, %v60
    %v129 = vpack.c.bf16 %v63, %v61
    %v130 = vpack.c.bf16 %v66, %v64
    %v131 = vpack.c.bf16 %v67, %v65
    %v132 = vpack.c.bf16 %v70, %v68
    %v133 = vpack.c.bf16 %v71, %v69
    %v134 = vpack.c.bf16 %v74, %v72
    %v135 = vpack.c.bf16 %v75, %v73
    %v136 = vpack.c.bf16 %v78, %v76
    %v137 = vpack.c.bf16 %v79, %v77
    %v138 = vpack.c.bf16 %v82, %v80
    %v139 = vpack.c.bf16 %v83, %v81
    %v140 = vpack.c.bf16 %v86, %v84
    %v141 = vpack.c.bf16 %v87, %v85
    %v142 = vpack.c.bf16 %v90, %v88
    %v143 = vpack.c.bf16 %v91, %v89
    %v144 = vpack.c.bf16 %v94, %v92
    %v145 = vpack.c.bf16 %v95, %v93
    %v146 = vpack.c.bf16 %v98, %v96
    %v147 = vpack.c.bf16 %v99, %v97
    %v148 = vpack.c.bf16 %v102, %v100
    %v149 = vpack.c.bf16 %v103, %v101
    %v150 = vpack.c.bf16 %v106, %v104
    %v151 = vpack.c.bf16 %v107, %v105
    %v152 = vpack.c.bf16 %v110, %v108
    %v153 = vpack.c.bf16 %v111, %v109
    %v154 = vpack.c.bf16 %v114, %v112
    %v155 = vpack.c.bf16 %v115, %v113
    %v156 = vpack.c.bf16 %v118, %v116
    %v157 = vpack.c.bf16 %v119, %v117
    %v158 = vld [vmem:[#allocation5] sm:$0xf]
    %v159 = vld [vmem:[#allocation5 + $0x4] sm:$0xf]
    %v160 = vld [vmem:[#allocation5 + $0x8] sm:$0xf]
    %v161 = vld [vmem:[#allocation5 + $0xc] sm:$0xf]
    %v162 = vld [vmem:[#allocation5 + $0x10] sm:$0xf]
    %v163 = vld [vmem:[#allocation5 + $0x14] sm:$0xf]
    %v164 = vld [vmem:[#allocation5 + $0x18] sm:$0xf]
    %v165 = vld [vmem:[#allocation5 + $0x1c] sm:$0xf]
    %v166 = vld [vmem:[#allocation5 + $0x20] sm:$0xf]
    %v167 = vld [vmem:[#allocation5 + $0x24] sm:$0xf]
    %v168 = vld [vmem:[#allocation5 + $0x28] sm:$0xf]
    %v169 = vld [vmem:[#allocation5 + $0x2c] sm:$0xf]
    %v170 = vld [vmem:[#allocation5 + $0x30] sm:$0xf]
    %v171 = vld [vmem:[#allocation5 + $0x34] sm:$0xf]
    %v172 = vld [vmem:[#allocation5 + $0x38] sm:$0xf]
    %v173 = vld [vmem:[#allocation5 + $0x3c] sm:$0xf]
    %v174 = vld [vmem:[#allocation5 + $0x40] sm:$0xf]
    %v175 = vld [vmem:[#allocation5 + $0x44] sm:$0xf]
    %v176 = vld [vmem:[#allocation5 + $0x48] sm:$0xf]
    %v177 = vld [vmem:[#allocation5 + $0x4c] sm:$0xf]
    %v178 = vld [vmem:[#allocation5 + $0x50] sm:$0xf]
    %v179 = vld [vmem:[#allocation5 + $0x54] sm:$0xf]
    %v180 = vld [vmem:[#allocation5 + $0x58] sm:$0xf]
    %v181 = vld [vmem:[#allocation5 + $0x5c] sm:$0xf]
    %v182 = vld [vmem:[#allocation5 + $0x60] sm:$0xf]
    %v183 = vld [vmem:[#allocation5 + $0x64] sm:$0xf]
    %v184 = vld [vmem:[#allocation5 + $0x68] sm:$0xf]
    %v185 = vld [vmem:[#allocation5 + $0x6c] sm:$0xf]
    %v186 = vld [vmem:[#allocation5 + $0x70] sm:$0xf]
    %v187 = vld [vmem:[#allocation5 + $0x74] sm:$0xf]
    %v188 = vld [vmem:[#allocation5 + $0x78] sm:$0xf]
    %v189 = vld [vmem:[#allocation5 + $0x7c] sm:$0xf]
    %v190 = vld [vmem:[%s2] sm:$0x3]
    %v191 = vlaneseq
    %v192 = vshrl.u32 %v191, 7
    %v193 = vsub.s32 0, %v192
    %v194 = vrot.slane %v190, %v193
    %v227 = vunpack.c.l.b16 %v158
    %v228 = vunpack.c.l.b16 %v159
    %v229 = vunpack.c.l.b16 %v160
    %v230 = vunpack.c.l.b16 %v161
    %v231 = vunpack.c.l.b16 %v162
    %v232 = vunpack.c.l.b16 %v163
    %v233 = vunpack.c.l.b16 %v164
    %v234 = vunpack.c.l.b16 %v165
    %v235 = vunpack.c.l.b16 %v166
    %v236 = vunpack.c.l.b16 %v167
    %v237 = vunpack.c.l.b16 %v168
    %v238 = vunpack.c.l.b16 %v169
    %v239 = vunpack.c.l.b16 %v170
    %v240 = vunpack.c.l.b16 %v171
    %v241 = vunpack.c.l.b16 %v172
    %v242 = vunpack.c.l.b16 %v173
    %v243 = vunpack.c.l.b16 %v174
    %v244 = vunpack.c.l.b16 %v175
    %v245 = vunpack.c.l.b16 %v176
    %v246 = vunpack.c.l.b16 %v177
    %v247 = vunpack.c.l.b16 %v178
    %v248 = vunpack.c.l.b16 %v179
    %v249 = vunpack.c.l.b16 %v180
    %v250 = vunpack.c.l.b16 %v181
    %v251 = vunpack.c.l.b16 %v182
    %v252 = vunpack.c.l.b16 %v183
    %v253 = vunpack.c.l.b16 %v184
    %v254 = vunpack.c.l.b16 %v185
    %v255 = vunpack.c.l.b16 %v186
    %v256 = vunpack.c.l.b16 %v187
    %v257 = vunpack.c.l.b16 %v188
    %v258 = vunpack.c.l.b16 %v189
    %v259 = vpack.c.b16 %v228, %v227
    %v260 = vpack.c.b16 %v230, %v229
    %v261 = vpack.c.b16 %v232, %v231
    %v262 = vpack.c.b16 %v234, %v233
    %v263 = vpack.c.b16 %v236, %v235
    %v264 = vpack.c.b16 %v238, %v237
    %v265 = vpack.c.b16 %v240, %v239
    %v266 = vpack.c.b16 %v242, %v241
    %v267 = vpack.c.b16 %v244, %v243
    %v268 = vpack.c.b16 %v246, %v245
    %v269 = vpack.c.b16 %v248, %v247
    %v270 = vpack.c.b16 %v250, %v249
    %v271 = vpack.c.b16 %v252, %v251
    %v272 = vpack.c.b16 %v254, %v253
    %v273 = vpack.c.b16 %v256, %v255
    %v274 = vpack.c.b16 %v258, %v257
    %291 = vmatprep.subr.bf16.mxu0 0
    %292 = vmatpush1.bf16.msra.mxu0 %v266
    %293 = vmatprep.subr.bf16.mxu0 0
    %294 = vmatpush1.bf16.msra.mxu0 %v265
    %295 = vmatprep.subr.bf16.mxu0 0
    %296 = vmatpush1.bf16.msra.mxu0 %v264
    %297 = vmatprep.subr.bf16.mxu0 0
    %298 = vmatpush1.bf16.msra.mxu0 %v263
    %299 = vmatprep.subr.bf16.mxu0 0
    %300 = vmatpush1.bf16.msra.mxu0 %v262
    %301 = vmatprep.subr.bf16.mxu0 0
    %302 = vmatpush1.bf16.msra.mxu0 %v261
    %303 = vmatprep.subr.bf16.mxu0 0
    %304 = vmatpush1.bf16.msra.mxu0 %v260
    %305 = vmatprep.subr.bf16.mxu0 0
    %306 = vmatpush1.bf16.msra.mxu0 %v259
    %307 = vmatprep.subr.bf16.mxu0 0
    %308 = vmatpush2.bf16.msra.mxu0 %v274
    %309 = vmatprep.subr.bf16.mxu0 0
    %310 = vmatpush2.bf16.msra.mxu0 %v273
    %311 = vmatprep.subr.bf16.mxu0 0
    %312 = vmatpush2.bf16.msra.mxu0 %v272
    %313 = vmatprep.subr.bf16.mxu0 0
    %314 = vmatpush2.bf16.msra.mxu0 %v271
    %315 = vmatprep.subr.bf16.mxu0 0
    %316 = vmatpush2.bf16.msra.mxu0 %v270
    %317 = vmatprep.subr.bf16.mxu0 0
    %318 = vmatpush2.bf16.msra.mxu0 %v269
    %319 = vmatprep.subr.bf16.mxu0 0
    %320 = vmatpush2.bf16.msra.mxu0 %v268
    %321 = vmatprep.subr.bf16.mxu0 0
    %322 = vmatpush2.bf16.msra.mxu0 %v267
    %323 = vmatprep.mubr.bf16.mxu0 %v121
    %324 = vmatmul.mubr.bf16.gmra.mxu0 %v120
    %v325 = vpop.f32.mrf.mxu0
    %v326 = vadd.f32 %v194, %v325
    %v327 = vpop.f32.mrf.mxu0
    %v328 = vpop.f32.mrf.mxu0
    %v329 = vadd.f32 %v194, %v328
    %v330 = vpop.f32.mrf.mxu0
    %331 = vmatprep.mubr.bf16.mxu0 %v123
    %332 = vmatmul.mubr.bf16.gmra.mxu0 %v122
    %v333 = vpop.f32.mrf.mxu0
    %v334 = vadd.f32 %v194, %v333
    %v335 = vpop.f32.mrf.mxu0
    %v336 = vpop.f32.mrf.mxu0
    %v337 = vadd.f32 %v194, %v336
    %v338 = vpop.f32.mrf.mxu0
    %339 = vmatprep.mubr.bf16.mxu0 %v125
    %340 = vmatmul.mubr.bf16.gmra.mxu0 %v124
    %v341 = vpop.f32.mrf.mxu0
    %v342 = vadd.f32 %v194, %v341
    %v343 = vpop.f32.mrf.mxu0
    %v344 = vpop.f32.mrf.mxu0
    %v345 = vadd.f32 %v194, %v344
    %v346 = vpop.f32.mrf.mxu0
    %347 = vmatprep.mubr.bf16.mxu0 %v127
    %348 = vmatmul.mubr.bf16.gmra.mxu0 %v126
    %v349 = vpop.f32.mrf.mxu0
    %v350 = vadd.f32 %v194, %v349
    %v351 = vpop.f32.mrf.mxu0
    %v352 = vpop.f32.mrf.mxu0
    %v353 = vadd.f32 %v194, %v352
    %v354 = vpop.f32.mrf.mxu0
    %355 = vmatprep.mubr.bf16.mxu0 %v129
    %356 = vmatmul.mubr.bf16.gmra.mxu0 %v128
    %v357 = vpop.f32.mrf.mxu0
    %v358 = vadd.f32 %v194, %v357
    %v359 = vpop.f32.mrf.mxu0
    %v360 = vpop.f32.mrf.mxu0
    %v361 = vadd.f32 %v194, %v360
    %v362 = vpop.f32.mrf.mxu0
    %363 = vmatprep.mubr.bf16.mxu0 %v131
    %364 = vmatmul.mubr.bf16.gmra.mxu0 %v130
    %v365 = vpop.f32.mrf.mxu0
    %v366 = vadd.f32 %v194, %v365
    %v367 = vpop.f32.mrf.mxu0
    %v368 = vpop.f32.mrf.mxu0
    %v369 = vadd.f32 %v194, %v368
    %v370 = vpop.f32.mrf.mxu0
    %371 = vmatprep.mubr.bf16.mxu0 %v133
    %372 = vmatmul.mubr.bf16.gmra.mxu0 %v132
    %v373 = vpop.f32.mrf.mxu0
    %v374 = vadd.f32 %v194, %v373
    %v375 = vpop.f32.mrf.mxu0
    %v376 = vpop.f32.mrf.mxu0
    %v377 = vadd.f32 %v194, %v376
    %v378 = vpop.f32.mrf.mxu0
    %379 = vmatprep.mubr.bf16.mxu0 %v135
    %380 = vmatmul.mubr.bf16.gmra.mxu0 %v134
    %v381 = vpop.f32.mrf.mxu0
    %v382 = vadd.f32 %v194, %v381
    %v383 = vpop.f32.mrf.mxu0
    %v384 = vpop.f32.mrf.mxu0
    %v385 = vadd.f32 %v194, %v384
    %v386 = vpop.f32.mrf.mxu0
    %387 = vmatprep.mubr.bf16.mxu0 %v137
    %388 = vmatmul.mubr.bf16.gmra.mxu0 %v136
    %v389 = vpop.f32.mrf.mxu0
    %v390 = vadd.f32 %v194, %v389
    %v391 = vpop.f32.mrf.mxu0
    %v392 = vpop.f32.mrf.mxu0
    %v393 = vadd.f32 %v194, %v392
    %v394 = vpop.f32.mrf.mxu0
    %395 = vmatprep.mubr.bf16.mxu0 %v139
    %396 = vmatmul.mubr.bf16.gmra.mxu0 %v138
    %v397 = vpop.f32.mrf.mxu0
    %v398 = vadd.f32 %v194, %v397
    %v399 = vpop.f32.mrf.mxu0
    %v400 = vpop.f32.mrf.mxu0
    %v401 = vadd.f32 %v194, %v400
    %v402 = vpop.f32.mrf.mxu0
    %403 = vmatprep.mubr.bf16.mxu0 %v141
    %404 = vmatmul.mubr.bf16.gmra.mxu0 %v140
    %v405 = vpop.f32.mrf.mxu0
    %v406 = vadd.f32 %v194, %v405
    %v407 = vpop.f32.mrf.mxu0
    %v408 = vpop.f32.mrf.mxu0
    %v409 = vadd.f32 %v194, %v408
    %v410 = vpop.f32.mrf.mxu0
    %411 = vmatprep.mubr.bf16.mxu0 %v143
    %412 = vmatmul.mubr.bf16.gmra.mxu0 %v142
    %v413 = vpop.f32.mrf.mxu0
    %v414 = vadd.f32 %v194, %v413
    %v415 = vpop.f32.mrf.mxu0
    %v416 = vpop.f32.mrf.mxu0
    %v417 = vadd.f32 %v194, %v416
    %v418 = vpop.f32.mrf.mxu0
    %419 = vmatprep.mubr.bf16.mxu0 %v145
    %420 = vmatmul.mubr.bf16.gmra.mxu0 %v144
    %v421 = vpop.f32.mrf.mxu0
    %v422 = vadd.f32 %v194, %v421
    %v423 = vpop.f32.mrf.mxu0
    %v424 = vpop.f32.mrf.mxu0
    %v425 = vadd.f32 %v194, %v424
    %v426 = vpop.f32.mrf.mxu0
    %427 = vmatprep.mubr.bf16.mxu0 %v147
    %428 = vmatmul.mubr.bf16.gmra.mxu0 %v146
    %v429 = vpop.f32.mrf.mxu0
    %v430 = vadd.f32 %v194, %v429
    %v431 = vpop.f32.mrf.mxu0
    %v432 = vpop.f32.mrf.mxu0
    %v433 = vadd.f32 %v194, %v432
    %v434 = vpop.f32.mrf.mxu0
    %435 = vmatprep.mubr.bf16.mxu0 %v149
    %436 = vmatmul.mubr.bf16.gmra.mxu0 %v148
    %v437 = vpop.f32.mrf.mxu0
    %v438 = vadd.f32 %v194, %v437
    %v439 = vpop.f32.mrf.mxu0
    %v440 = vpop.f32.mrf.mxu0
    %v441 = vadd.f32 %v194, %v440
    %v442 = vpop.f32.mrf.mxu0
    %443 = vmatprep.mubr.bf16.mxu0 %v151
    %444 = vmatmul.mubr.bf16.gmra.mxu0 %v150
    %v445 = vpop.f32.mrf.mxu0
    %v446 = vadd.f32 %v194, %v445
    %v447 = vpop.f32.mrf.mxu0
    %v448 = vpop.f32.mrf.mxu0
    %v449 = vadd.f32 %v194, %v448
    %v450 = vpop.f32.mrf.mxu0
    %451 = vmatprep.mubr.bf16.mxu0 %v153
    %452 = vmatmul.mubr.bf16.gmra.mxu0 %v152
    %v453 = vpop.f32.mrf.mxu0
    %v454 = vadd.f32 %v194, %v453
    %v455 = vpop.f32.mrf.mxu0
    %v456 = vpop.f32.mrf.mxu0
    %v457 = vadd.f32 %v194, %v456
    %v458 = vpop.f32.mrf.mxu0
    %459 = vmatprep.mubr.bf16.mxu0 %v155
    %460 = vmatmul.mubr.bf16.gmra.mxu0 %v154
    %v461 = vpop.f32.mrf.mxu0
    %v462 = vadd.f32 %v194, %v461
    %v463 = vpop.f32.mrf.mxu0
    %v464 = vpop.f32.mrf.mxu0
    %v465 = vadd.f32 %v194, %v464
    %v466 = vpop.f32.mrf.mxu0
    %467 = vmatprep.mubr.bf16.mxu0 %v157
    %468 = vmatmul.mubr.bf16.gmra.mxu0 %v156
    %v469 = vpop.f32.mrf.mxu0
    %v470 = vadd.f32 %v194, %v469
    %v471 = vpop.f32.mrf.mxu0
    %v472 = vpop.f32.mrf.mxu0
    %v473 = vadd.f32 %v194, %v472
    %v474 = vpop.f32.mrf.mxu0
    %475 = vdwg.mxu0
    %vm476 = vcmp.gt.f32.partialorder %v326, 0.0
    %vm477 = vcmp.gt.f32.partialorder %v329, 0.0
    %vm478 = vcmp.gt.f32.partialorder %v334, 0.0
    %vm479 = vcmp.gt.f32.partialorder %v337, 0.0
    %vm480 = vcmp.gt.f32.partialorder %v342, 0.0
    %vm481 = vcmp.gt.f32.partialorder %v345, 0.0
    %vm482 = vcmp.gt.f32.partialorder %v350, 0.0
    %vm483 = vcmp.gt.f32.partialorder %v353, 0.0
    %vm484 = vcmp.gt.f32.partialorder %v358, 0.0
    %vm485 = vcmp.gt.f32.partialorder %v361, 0.0
    %vm486 = vcmp.gt.f32.partialorder %v366, 0.0
    %vm487 = vcmp.gt.f32.partialorder %v369, 0.0
    %vm488 = vcmp.gt.f32.partialorder %v374, 0.0
    %vm489 = vcmp.gt.f32.partialorder %v377, 0.0
    %vm490 = vcmp.gt.f32.partialorder %v382, 0.0
    %vm491 = vcmp.gt.f32.partialorder %v385, 0.0
    %vm492 = vcmp.gt.f32.partialorder %v390, 0.0
    %vm493 = vcmp.gt.f32.partialorder %v393, 0.0
    %vm494 = vcmp.gt.f32.partialorder %v398, 0.0
    %vm495 = vcmp.gt.f32.partialorder %v401, 0.0
    %vm496 = vcmp.gt.f32.partialorder %v406, 0.0
    %vm497 = vcmp.gt.f32.partialorder %v409, 0.0
    %vm498 = vcmp.gt.f32.partialorder %v414, 0.0
    %vm499 = vcmp.gt.f32.partialorder %v417, 0.0
    %vm500 = vcmp.gt.f32.partialorder %v422, 0.0
    %vm501 = vcmp.gt.f32.partialorder %v425, 0.0
    %vm502 = vcmp.gt.f32.partialorder %v430, 0.0
    %vm503 = vcmp.gt.f32.partialorder %v433, 0.0
    %vm504 = vcmp.gt.f32.partialorder %v438, 0.0
    %vm505 = vcmp.gt.f32.partialorder %v441, 0.0
    %vm506 = vcmp.gt.f32.partialorder %v446, 0.0
    %vm507 = vcmp.gt.f32.partialorder %v449, 0.0
    %vm508 = vcmp.gt.f32.partialorder %v454, 0.0
    %vm509 = vcmp.gt.f32.partialorder %v457, 0.0
    %vm510 = vcmp.gt.f32.partialorder %v462, 0.0
    %vm511 = vcmp.gt.f32.partialorder %v465, 0.0
    %vm512 = vcmp.gt.f32.partialorder %v470, 0.0
    %vm513 = vcmp.gt.f32.partialorder %v473, 0.0
    %v514 = vlaneseq
    %v515 = vshrl.u32 %v514, 7
    %v516 = vsub.s32 1, %v515
    %v517 = vrot.slane %v190, %v516
    %v518 = vmul.f32 %v517, %v326
    %v519 = vmul.f32 %v517, %v329
    %v520 = vmul.f32 %v517, %v334
    %v521 = vmul.f32 %v517, %v337
    %v522 = vmul.f32 %v517, %v342
    %v523 = vmul.f32 %v517, %v345
    %v524 = vmul.f32 %v517, %v350
    %v525 = vmul.f32 %v517, %v353
    %v526 = vmul.f32 %v517, %v358
    %v527 = vmul.f32 %v517, %v361
    %v528 = vmul.f32 %v517, %v366
    %v529 = vmul.f32 %v517, %v369
    %v530 = vmul.f32 %v517, %v374
    %v531 = vmul.f32 %v517, %v377
    %v532 = vmul.f32 %v517, %v382
    %v533 = vmul.f32 %v517, %v385
    %v534 = vmul.f32 %v517, %v390
    %v535 = vmul.f32 %v517, %v393
    %v536 = vmul.f32 %v517, %v398
    %v537 = vmul.f32 %v517, %v401
    %v538 = vmul.f32 %v517, %v406
    %v539 = vmul.f32 %v517, %v409
    %v540 = vmul.f32 %v517, %v414
    %v541 = vmul.f32 %v517, %v417
    %v542 = vmul.f32 %v517, %v422
    %v543 = vmul.f32 %v517, %v425
    %v544 = vmul.f32 %v517, %v430
    %v545 = vmul.f32 %v517, %v433
    %v546 = vmul.f32 %v517, %v438
    %v547 = vmul.f32 %v517, %v441
    %v548 = vmul.f32 %v517, %v446
    %v549 = vmul.f32 %v517, %v449
    %v550 = vmul.f32 %v517, %v454
    %v551 = vmul.f32 %v517, %v457
    %v552 = vmul.f32 %v517, %v462
    %v553 = vmul.f32 %v517, %v465
    %v554 = vmul.f32 %v517, %v470
    %v555 = vmul.f32 %v517, %v473
    %v556 = vsel %vm476, %v326, %v518
    %v557 = vsel %vm477, %v329, %v519
    %v558 = vsel %vm478, %v334, %v520
    %v559 = vsel %vm479, %v337, %v521
    %v560 = vsel %vm480, %v342, %v522
    %v561 = vsel %vm481, %v345, %v523
    %v562 = vsel %vm482, %v350, %v524
    %v563 = vsel %vm483, %v353, %v525
    %v564 = vsel %vm484, %v358, %v526
    %v565 = vsel %vm485, %v361, %v527
    %v566 = vsel %vm486, %v366, %v528
    %v567 = vsel %vm487, %v369, %v529
    %v568 = vsel %vm488, %v374, %v530
    %v569 = vsel %vm489, %v377, %v531
    %v570 = vsel %vm490, %v382, %v532
    %v571 = vsel %vm491, %v385, %v533
    %v572 = vsel %vm492, %v390, %v534
    %v573 = vsel %vm493, %v393, %v535
    %v574 = vsel %vm494, %v398, %v536
    %v575 = vsel %vm495, %v401, %v537
    %v576 = vsel %vm496, %v406, %v538
    %v577 = vsel %vm497, %v409, %v539
    %v578 = vsel %vm498, %v414, %v540
    %v579 = vsel %vm499, %v417, %v541
    %v580 = vsel %vm500, %v422, %v542
    %v581 = vsel %vm501, %v425, %v543
    %v582 = vsel %vm502, %v430, %v544
    %v583 = vsel %vm503, %v433, %v545
    %v584 = vsel %vm504, %v438, %v546
    %v585 = vsel %vm505, %v441, %v547
    %v586 = vsel %vm506, %v446, %v548
    %v587 = vsel %vm507, %v449, %v549
    %v588 = vsel %vm508, %v454, %v550
    %v589 = vsel %vm509, %v457, %v551
    %v590 = vsel %vm510, %v462, %v552
    %v591 = vsel %vm511, %v465, %v553
    %v592 = vsel %vm512, %v470, %v554
    %v593 = vsel %vm513, %v473, %v555
    %594 = vst [vmem:[#allocation7] sm:$0xff] %v556
    %595 = vst [vmem:[#allocation7 + $0x8] sm:$0xff] %v557
    %596 = vst [vmem:[#allocation7 + $0x10] sm:$0xff] %v558
    %597 = vst [vmem:[#allocation7 + $0x18] sm:$0xff] %v559
    %598 = vst [vmem:[#allocation7 + $0x20] sm:$0xff] %v560
    %599 = vst [vmem:[#allocation7 + $0x28] sm:$0xff] %v561
    %600 = vst [vmem:[#allocation7 + $0x30] sm:$0xff] %v562
    %601 = vst [vmem:[#allocation7 + $0x38] sm:$0xff] %v563
    %602 = vst [vmem:[#allocation7 + $0x40] sm:$0xff] %v564
    %603 = vst [vmem:[#allocation7 + $0x48] sm:$0xff] %v565
    %604 = vst [vmem:[#allocation7 + $0x50] sm:$0xff] %v566
    %605 = vst [vmem:[#allocation7 + $0x58] sm:$0xff] %v567
    %606 = vst [vmem:[#allocation7 + $0x60] sm:$0xff] %v568
    %607 = vst [vmem:[#allocation7 + $0x68] sm:$0xff] %v569
    %608 = vst [vmem:[#allocation7 + $0x70] sm:$0xff] %v570
    %609 = vst [vmem:[#allocation7 + $0x78] sm:$0xff] %v571
    %610 = vst [vmem:[#allocation7 + $0x80] sm:$0xff] %v572
    %611 = vst [vmem:[#allocation7 + $0x88] sm:$0xff] %v573
    %612 = vst [vmem:[#allocation7 + $0x90] sm:$0xff] %v574
    %613 = vst [vmem:[#allocation7 + $0x98] sm:$0xff] %v575
    %614 = vst [vmem:[#allocation7 + $0xa0] sm:$0xff] %v576
    %615 = vst [vmem:[#allocation7 + $0xa8] sm:$0xff] %v577
    %616 = vst [vmem:[#allocation7 + $0xb0] sm:$0xff] %v578
    %617 = vst [vmem:[#allocation7 + $0xb8] sm:$0xff] %v579
    %618 = vst [vmem:[#allocation7 + $0xc0] sm:$0xff] %v580
    %619 = vst [vmem:[#allocation7 + $0xc8] sm:$0xff] %v581
    %620 = vst [vmem:[#allocation7 + $0xd0] sm:$0xff] %v582
    %621 = vst [vmem:[#allocation7 + $0xd8] sm:$0xff] %v583
    %622 = vst [vmem:[#allocation7 + $0xe0] sm:$0xff] %v584
    %623 = vst [vmem:[#allocation7 + $0xe8] sm:$0xff] %v585
    %624 = vst [vmem:[#allocation7 + $0xf0] sm:$0xff] %v586
    %625 = vst [vmem:[#allocation7 + $0xf8] sm:$0xff] %v587
    %626 = vst [vmem:[#allocation7 + $0x100] sm:$0xff] %v588
    %627 = vst [vmem:[#allocation7 + $0x108] sm:$0xff] %v589
    %628 = vst [vmem:[#allocation7 + $0x110] sm:$0xff] %v590
    %629 = vst [vmem:[#allocation7 + $0x118] sm:$0xff] %v591
    %630 = vst [vmem:[#allocation7 + $0x120] sm:$0xff] %v592
    %631 = vst [vmem:[#allocation7 + $0x128] sm:$0xff] %v593
    // Predicated region
    $region22: #{tpu_custom_call.1} parent=1 // pred_check
      _
    $region23: #{tpu_custom_call.1} parent=1 // pred_check_branch
      %633 = sbr.rel (0) target = $region25
    $region24: #{tpu_custom_call.1} parent=1 // pred_region
      %s635 = ssub.s32 4864, 4864
      %636 = vsyncadd [#allocation4], %s635
      %s637 = sshll.u32 [#allocation7], 4
      %s638 = int_to_ptr.vmem [resolvable:$true] %s637
      %643 = dma.vmem_to_hbm [thread:$0]  %s638, 4864, %s3, [#allocation4], 128, 128, 8
    $region25: #{tpu_custom_call.1} parent=1 // pred_fallthru
      _
    // Predicated region
    $region26: #{tpu_custom_call.1} parent=1 // pred_check
      _
    $region27: #{tpu_custom_call.1} parent=1 // pred_check_branch
      %645 = sbr.rel (0) target = $region29
    $region28: #{tpu_custom_call.1} parent=1 // pred_region
      %646 = dma.done [#allocation4], 4864
    $region29: #{tpu_custom_call.1} parent=1 // pred_fallthru
      _
    %647 = vsyncpa [#allocation3], 1
    %648 = vsyncpa [#allocation6], 1
    %649 = vsyncpa [#allocation4], 1

</llo_original>
